<compile_context>
chip_gen: v5e
topology: v5e:2x2
jax: 0.10.0
libtpu: 0.0.40
codegen_flags: <defaults>
</compile_context>

<pallas_src>
import jax
import jax.numpy as jnp
from jax.experimental import pallas as pl
from jax.experimental.pallas import tpu as pltpu

# ----- toy model dims (consistent with the module's shapes) -----
VOCAB      = 128      # shared toy vocab for backpack + llama (real: 50257 slice)
N_EMBD     = 32
NUM_SENSES = 4
BATCH      = 2
SEQLEN     = 8


# --------------------------- Pallas kernel --------------------------------
def _llama_backpack_kernel(wgt_ref, c_ref, e_ref, s01_ref, w_ref, llama_ref,
                           lm_ref, mod_ref):
    """Single grid step processes the whole (tiny) batch.

    wgt_ref   : (1, 1)         SMEM  backpack_weight scalar
    c_ref     : (B, S, K*S)    VMEM  f32  contextualization, columns ordered (k*S + s)
    e_ref     : (B, 1, K*S)    VMEM  f32  epsilons, folded onto the contraction axis
    s01_ref   : (B, K*S, 2D)   VMEM  bf16 [base senses || modified senses] on D axis
    w_ref     : (D, V)         VMEM  bf16 lm_head weight (tied wte), pre-transposed
    llama_ref : (B*S, V)       VMEM  f32  llama logits, rows flattened over (b, s)
    lm_ref    : (B*S, V)       VMEM out  combined logits
    mod_ref   : (B*S, V)       VMEM out  backpack_modification (log-softmax diff)
    """
    B, S, _ = c_ref.shape
    D = w_ref.shape[0]
    n_rows = B * S

    # Epsilon scaling applied to the contextualization columns (the contraction
    # / key index): mathematically identical to scaling the sense rows, but
    # touches S*K*S elements instead of S*K*D.  The multiply stays f32 (VPU);
    # a single cast makes the MXU operand bf16.
    ce = (c_ref[...] * e_ref[...]).astype(jnp.bfloat16)              # (B, S, K*S)

    # Sense mixing: ONE (S, K*S) @ (K*S, 2D) MXU push per batch row covering
    # BOTH passes (untuned hidden in the first D columns, tuned in the last D).
    # Results are kept vreg-resident -- no VMEM scratch round trip.
    h0_parts, h1_parts = [], []
    for b in range(B):                                               # static, B tiny
        hb = jnp.dot(ce[b], s01_ref[b],
                     preferred_element_type=jnp.float32)             # (S, 2D) f32
        h0_parts.append(hb[:, :D])                                   # untuned hidden
        h1_parts.append(hb[:, D:])                                   # tuned hidden
    h_all = jnp.concatenate(h0_parts + h1_parts, axis=0)             # (2*B*S, D) f32

    # lm_head over ALL 2*B*S hidden rows in a single bf16 MXU pass
    # (batched over batch, sequence and both passes), f32 accumulation.
    logits = jnp.dot(h_all.astype(jnp.bfloat16), w_ref[...],
                     preferred_element_type=jnp.float32)             # (2*B*S, V)

    # Stable per-row logsumexp along the lane-dense vocab axis (f32 VPU/EUP).
    m = jnp.max(logits, axis=-1, keepdims=True)
    lse = m + jnp.log(jnp.sum(jnp.exp(logits - m), axis=-1, keepdims=True))  # (2*B*S, 1)

    # backpack_modification = log_softmax(tuned) - log_softmax(untuned)
    #                       = (logits_t - logits_u) - (lse_t - lse_u)
    # -> no full lsm tensors materialized; the lse correction is a (rows,1) broadcast.
    mod = (logits[n_rows:, :] - logits[:n_rows, :]) \
        - (lse[n_rows:, :] - lse[:n_rows, :])                        # (B*S, V)
    mod_ref[...] = mod
    lm_ref[...] = llama_ref[...] + wgt_ref[0, 0] * mod


def llama_with_a_backpack_pallas(backpack_weight, contextualization, senses,
                                 senses_tuned, epsilons, lm_w_t_bf16, llama_logits):
    """Wrapper-side layout plumbing + one single-step pallas_call."""
    B, K, S, _ = contextualization.shape
    D = senses.shape[-1]
    V = lm_w_t_bf16.shape[-1]
    KS = K * S
    n_rows = B * S

    # Layout plumbing (outside the kernel): fuse the sense axis into the
    # contraction axis, and concatenate base||tuned senses along D so the
    # in-kernel mixing is ONE matmul per batch row covering both passes.
    c_r = jnp.transpose(contextualization, (0, 2, 1, 3)).reshape(B, S, KS)
    c_r = c_r.astype(jnp.float32)
    s01_r = jnp.concatenate(
        [senses.reshape(B, KS, D), senses_tuned.reshape(B, KS, D)],
        axis=-1).astype(jnp.bfloat16)                                # (B, KS, 2D)
    e_r = epsilons.reshape(B, KS)[:, None, :].astype(jnp.float32)    # (B,K,S,1) -> (B,1,K*S)
    llama_2d = llama_logits.astype(jnp.float32).reshape(n_rows, V)
    wgt = jnp.asarray(backpack_weight, jnp.float32).reshape(1, 1)

    # NOTE(real sizes, D~768 / V~50k / S~512):
    #   * the bf16 (D, V_tile) weight and (rows, V_tile) logits must stream over
    #     a vocab grid axis (V_tile a multiple of 128, ~512-2048), with an
    #     online / two-pass logsumexp carried in (rows, 1) VMEM scratch and
    #     finalized with pl.when on the last vocab tile -- the single-shot
    #     max/sum below is only valid because V=128 fits one block;
    #   * add a "parallel" row-tile grid axis so v7x's 2nd TensorCore is used;
    #   * size tiles for v7x's 64 MiB VMEM and set vmem_limit_bytes explicitly;
    #     on v5e raise the weight BlockSpec to pipeline_mode=pl.Buffered(3);
    #   * slice llama_logits[:, :, :50257] (or bake it into its index_map)
    #     before the fused add.  At these toy dims the full working set is a
    #     few tens of KB, so one grid step on one core is best.
    out_shape = (jax.ShapeDtypeStruct((n_rows, V), jnp.float32),
                 jax.ShapeDtypeStruct((n_rows, V), jnp.float32))
    lm2d, mod2d = pl.pallas_call(
        _llama_backpack_kernel,
        out_shape=out_shape,
        grid=(1,),                         # single step: no per-step pipeline overhead
        in_specs=[
            pl.BlockSpec((1, 1), lambda i: (0, 0),
                         memory_space=pltpu.MemorySpace.SMEM),        # backpack_weight
            pl.BlockSpec((B, S, KS),  lambda i: (0, 0, 0)),           # contextualization (f32)
            pl.BlockSpec((B, 1, KS),  lambda i: (0, 0, 0)),           # epsilons (f32)
            pl.BlockSpec((B, KS, 2 * D), lambda i: (0, 0, 0)),        # senses base||tuned (bf16)
            pl.BlockSpec((D, V),      lambda i: (0, 0)),              # lm_head weight^T (bf16)
            pl.BlockSpec((n_rows, V), lambda i: (0, 0)),              # llama logits (f32)
        ],
        out_specs=[
            pl.BlockSpec((n_rows, V), lambda i: (0, 0)),              # lm_logits
            pl.BlockSpec((n_rows, V), lambda i: (0, 0)),              # backpack_modification
        ],
        compiler_params=pltpu.CompilerParams(
            dimension_semantics=("arbitrary",)),
    )(wgt, c_r, e_r, s01_r, lm_w_t_bf16, llama_2d)
    return lm2d.reshape(B, S, V), mod2d.reshape(B, S, V)


# ----------------------- plain-JAX glue / stand-ins ------------------------
def init_params(key):
    ks = jax.random.split(key, 8)
    wte        = jax.random.normal(ks[0], (VOCAB, N_EMBD), jnp.float32) * 0.1
    w_sense    = jax.random.normal(ks[1], (N_EMBD, NUM_SENSES * N_EMBD), jnp.float32) * 0.3
    w_ctx      = jax.random.normal(ks[2], (N_EMBD, N_EMBD), jnp.float32) * 0.3
    wq         = jax.random.normal(ks[3], (N_EMBD, N_EMBD), jnp.float32) * 0.3
    wk         = jax.random.normal(ks[4], (N_EMBD, N_EMBD), jnp.float32) * 0.3
    w_mod      = jax.random.normal(ks[5], (N_EMBD, N_EMBD), jnp.float32) * 0.3
    llama_wte  = jax.random.normal(ks[6], (VOCAB, N_EMBD), jnp.float32) * 0.1
    llama_head = jax.random.normal(ks[7], (N_EMBD, VOCAB), jnp.float32) * 0.3
    # matches: self.epsilons.weight = nn.Parameter(torch.ones(vocab, num_senses))
    eps_tab = jnp.ones((VOCAB, NUM_SENSES), jnp.float32)
    # tied lm_head weight: transpose + bf16 MXU cast hoisted out of the forward path
    lm_w_t = wte.T.astype(jnp.bfloat16)                               # (D, V)
    return dict(wte=wte, w_sense=w_sense, w_ctx=w_ctx, wq=wq, wk=wk,
                w_mod=w_mod, llama_wte=llama_wte, llama_head=llama_head,
                eps=eps_tab, lm_w_t=lm_w_t)


def backpack_and_llama_inputs(params, input_ids):
    """Stand-ins for the external black-box sub-modules (module-layout tensors)."""
    B, S = input_ids.shape
    emb = params['wte'][input_ids]                                      # (B,S,D)

    # TODO(synk): real backpack.sense_network is an MLP + layernorm; linear stand-in.
    senses = (emb @ params['w_sense']).reshape(B, S, NUM_SENSES, N_EMBD)
    senses = jnp.transpose(senses, (0, 2, 1, 3))                        # (B,K,S,D)

    # TODO(synk): real backpack.gpt2_model is a full GPT-2 transformer; tanh-linear stand-in.
    h_ctx = jnp.tanh(emb @ params['w_ctx'])                             # (B,S,D)

    # TODO(synk): real backpack.sense_weight_net internals not given; causal multi-sense
    #             attention stand-in producing (B,K,S,S) softmax weights.
    dh = N_EMBD // NUM_SENSES
    q = (h_ctx @ params['wq']).reshape(B, S, NUM_SENSES, dh).transpose(0, 2, 1, 3)
    k = (h_ctx @ params['wk']).reshape(B, S, NUM_SENSES, dh).transpose(0, 2, 1, 3)
    scores = jnp.einsum('bkqd,bkmd->bkqm', q, k) / jnp.sqrt(jnp.float32(dh))
    mask = jnp.tril(jnp.ones((S, S), dtype=bool))
    scores = jnp.where(mask[None, None], scores, jnp.float32(-1e30))
    contextualization = jax.nn.softmax(scores, axis=-1)                 # (B,K,S,S)

    # epsilons(input_ids).unsqueeze(3).transpose(1, 2) -> (B,K,S,1)
    eps = jnp.transpose(params['eps'][input_ids], (0, 2, 1))[..., None]

    # TODO(synk): the second norm_backpack pass applies an internal sense modification
    #             (train_epsilon / train_senses_low branches, not given); additive
    #             tanh-linear stand-in.
    sense_mod = jnp.tanh(senses @ params['w_mod'])                      # (B,K,S,D)

    # TODO(synk): real llama_lm is a full LLaMA transformer under bf16 autocast with
    #             flash SDP; embedding + linear head stand-in in f32.
    llama_logits = jnp.tanh(params['llama_wte'][input_ids]) @ params['llama_head']

    return contextualization, senses, eps, sense_mod, llama_logits


def llama_with_a_backpack_forward(params, input_ids, backpack_weight=1.0):
    C, senses, eps, sense_mod, llama_logits = backpack_and_llama_inputs(params, input_ids)
    senses_tuned = senses + sense_mod
    # TODO(synk): at real vocab sizes slice llama_logits[:, :, :50257] before combining;
    #             at toy dims both vocabularies coincide (V = 128).
    lm_logits, backpack_modification = llama_with_a_backpack_pallas(
        backpack_weight, C, senses, senses_tuned, eps, params['lm_w_t'], llama_logits)
    # BackpackGPT2LMHeadModelOutput(logits, backpack_modification, sense_diffs, senses, contextualization)
    return lm_logits, backpack_modification, sense_mod, senses, C


# ------------------------------- main --------------------------------------
if __name__ == "__main__":
    key = jax.random.PRNGKey(0)
    k_param, k_ids, k_eps = jax.random.split(key, 3)
    params = init_params(k_param)
    # Perturb the ones-initialized epsilons so the folded-epsilon path is actually
    # exercised (verifies it scales the contraction/key index, not the query index).
    params['eps'] = params['eps'] + 0.1 * jax.random.normal(k_eps, params['eps'].shape)
    input_ids = jax.random.randint(k_ids, (BATCH, SEQLEN), 0, VOCAB)

    lm_logits, mod, sense_mod, senses, C = llama_with_a_backpack_forward(
        params, input_ids, backpack_weight=1.0)
    jax.block_until_ready((lm_logits, mod))

    assert lm_logits.shape == (BATCH, SEQLEN, VOCAB)
    assert mod.shape == (BATCH, SEQLEN, VOCAB)
    assert C.shape == (BATCH, NUM_SENSES, SEQLEN, SEQLEN)

    Cr, Sns, E, Smod, Llog = backpack_and_llama_inputs(params, input_ids)

    # --- reference 1: bf16-MXU-matched (same operand precision / epsilon fold as kernel) ---
    E_key = jnp.squeeze(E, -1)[:, :, None, :]                      # eps on the key index
    ce_bf = (Cr * E_key).astype(jnp.bfloat16)
    s0_bf = Sns.astype(jnp.bfloat16)
    s1_bf = (Sns + Smod).astype(jnp.bfloat16)
    h0 = jnp.einsum('bkqs,bksd->bqd', ce_bf, s0_bf, preferred_element_type=jnp.float32)
    h1 = jnp.einsum('bkqs,bksd->bqd', ce_bf, s1_bf, preferred_element_type=jnp.float32)
    w_bf = params['lm_w_t']
    l0 = jax.nn.log_softmax(jnp.dot(h0.astype(jnp.bfloat16), w_bf,
                                    preferred_element_type=jnp.float32), axis=-1)
    l1 = jax.nn.log_softmax(jnp.dot(h1.astype(jnp.bfloat16), w_bf,
                                    preferred_element_type=jnp.float32), axis=-1)
    mod_ref = l1 - l0
    lm_ref = Llog + 1.0 * mod_ref
    assert jnp.allclose(mod, mod_ref, atol=2e-3, rtol=2e-3), "mod mismatch (bf16-matched)"
    assert jnp.allclose(lm_logits, lm_ref, atol=2e-3, rtol=2e-3), "logits mismatch (bf16-matched)"

    # --- reference 2: pure-f32 module-order semantics (loose tol: kernel uses bf16 MXU ops) ---
    h0f = jnp.einsum('bkqs,bksd->bqd', Cr, Sns * E)
    h1f = jnp.einsum('bkqs,bksd->bqd', Cr, (Sns + Smod) * E)
    l0f = jax.nn.log_softmax(h0f @ params['wte'].T, axis=-1)
    l1f = jax.nn.log_softmax(h1f @ params['wte'].T, axis=-1)
    assert jnp.allclose(mod, l1f - l0f, atol=2e-2, rtol=2e-2), "mod mismatch (f32 semantics)"
    assert jnp.allclose(lm_logits, Llog + (l1f - l0f), atol=2e-2, rtol=2e-2), \
        "logits mismatch (f32 semantics)"

    print("KERNEL_OK")
</pallas_src>

<mosaic_0001>
module attributes {stable_mosaic.version = 11 : i64} {
  func.func @_llama_backpack_kernel(%arg0: i32, %arg1: memref<1x1xf32, #tpu.memory_space<smem>>, %arg2: memref<2x8x32xf32, #tpu.memory_space<vmem>>, %arg3: memref<2x1x32xf32, #tpu.memory_space<vmem>>, %arg4: memref<2x32x64xbf16, #tpu.memory_space<vmem>>, %arg5: memref<32x128xbf16, #tpu.memory_space<vmem>>, %arg6: memref<16x128xf32, #tpu.memory_space<vmem>>, %arg7: memref<16x128xf32, #tpu.memory_space<vmem>>, %arg8: memref<16x128xf32, #tpu.memory_space<vmem>>) attributes {dimension_semantics = [#tpu.dimension_semantics<arbitrary>], iteration_bounds = array<i64: 1>, scalar_prefetch = 0 : i64, scratch_operands = 0 : i64, tpu.core_type = #tpu.core_type<tc>, window_params = [{transform_indices = @transform_0, window_bounds = array<i64: 1, 1>}, {pipeline_mode = #tpu.pipeline_mode<synchronous>, transform_indices = @transform_1, window_bounds = array<i64: 2, 8, 32>}, {pipeline_mode = #tpu.pipeline_mode<synchronous>, transform_indices = @transform_2, window_bounds = array<i64: 2, 1, 32>}, {pipeline_mode = #tpu.pipeline_mode<synchronous>, transform_indices = @transform_3, window_bounds = array<i64: 2, 32, 64>}, {pipeline_mode = #tpu.pipeline_mode<synchronous>, transform_indices = @transform_4, window_bounds = array<i64: 32, 128>}, {pipeline_mode = #tpu.pipeline_mode<synchronous>, transform_indices = @transform_5, window_bounds = array<i64: 16, 128>}, {pipeline_mode = #tpu.pipeline_mode<synchronous>, transform_indices = @transform_6, window_bounds = array<i64: 16, 128>}, {pipeline_mode = #tpu.pipeline_mode<synchronous>, transform_indices = @transform_7, window_bounds = array<i64: 16, 128>}]} {
    %c0 = arith.constant 0 : index
    %c0_0 = arith.constant 0 : index
    %c0_1 = arith.constant 0 : index
    %0 = vector.load %arg2[%c0, %c0_0, %c0_1] : memref<2x8x32xf32, #tpu.memory_space<vmem>>, vector<2x8x32xf32>
    %c0_2 = arith.constant 0 : index
    %c0_3 = arith.constant 0 : index
    %c0_4 = arith.constant 0 : index
    %1 = vector.load %arg3[%c0_2, %c0_3, %c0_4] : memref<2x1x32xf32, #tpu.memory_space<vmem>>, vector<2x1x32xf32>
    %2 = vector.broadcast %1 : vector<2x1x32xf32> to vector<2x8x32xf32>
    %3 = arith.mulf %0, %2 : vector<2x8x32xf32>
    %4 = arith.truncf %3 : vector<2x8x32xf32> to vector<2x8x32xbf16>
    %5 = vector.extract_strided_slice %4 {offsets = [0, 0, 0], sizes = [1, 8, 32], strides = [1, 1, 1]} : vector<2x8x32xbf16> to vector<1x8x32xbf16>
    %6 = vector.shape_cast %5 : vector<1x8x32xbf16> to vector<8x32xbf16>
    %c0_5 = arith.constant 0 : index
    %c0_6 = arith.constant 0 : index
    %c0_7 = arith.constant 0 : index
    %7 = vector.load %arg4[%c0_5, %c0_6, %c0_7] : memref<2x32x64xbf16, #tpu.memory_space<vmem>>, vector<1x32x64xbf16>
    %8 = vector.shape_cast %7 : vector<1x32x64xbf16> to vector<32x64xbf16>
    %cst = arith.constant dense<0.000000e+00> : vector<8x64xf32>
    %9 = tpu.matmul %6, %8, %cst {dimension_numbers = #tpu.dot_dimension_numbers<[1], [0], [0], [1], [0, 0, 1, 1], [], []>} : vector<8x32xbf16>, vector<32x64xbf16>, vector<8x64xf32> -> vector<8x64xf32>
    %10 = vector.extract_strided_slice %9 {offsets = [0, 0], sizes = [8, 32], strides = [1, 1]} : vector<8x64xf32> to vector<8x32xf32>
    %11 = vector.extract_strided_slice %9 {offsets = [0, 32], sizes = [8, 32], strides = [1, 1]} : vector<8x64xf32> to vector<8x32xf32>
    %12 = vector.extract_strided_slice %4 {offsets = [1, 0, 0], sizes = [1, 8, 32], strides = [1, 1, 1]} : vector<2x8x32xbf16> to vector<1x8x32xbf16>
    %13 = vector.shape_cast %12 : vector<1x8x32xbf16> to vector<8x32xbf16>
    %c1 = arith.constant 1 : index
    %c0_8 = arith.constant 0 : index
    %c0_9 = arith.constant 0 : index
    %14 = vector.load %arg4[%c1, %c0_8, %c0_9] : memref<2x32x64xbf16, #tpu.memory_space<vmem>>, vector<1x32x64xbf16>
    %15 = vector.shape_cast %14 : vector<1x32x64xbf16> to vector<32x64xbf16>
    %cst_10 = arith.constant dense<0.000000e+00> : vector<8x64xf32>
    %16 = tpu.matmul %13, %15, %cst_10 {dimension_numbers = #tpu.dot_dimension_numbers<[1], [0], [0], [1], [0, 0, 1, 1], [], []>} : vector<8x32xbf16>, vector<32x64xbf16>, vector<8x64xf32> -> vector<8x64xf32>
    %17 = vector.extract_strided_slice %16 {offsets = [0, 0], sizes = [8, 32], strides = [1, 1]} : vector<8x64xf32> to vector<8x32xf32>
    %18 = vector.extract_strided_slice %16 {offsets = [0, 32], sizes = [8, 32], strides = [1, 1]} : vector<8x64xf32> to vector<8x32xf32>
    %19 = tpu.concatenate %10, %17, %11, %18 in 0 : vector<8x32xf32>, vector<8x32xf32>, vector<8x32xf32>, vector<8x32xf32> -> vector<32x32xf32>
    %20 = arith.truncf %19 : vector<32x32xf32> to vector<32x32xbf16>
    %c0_11 = arith.constant 0 : index
    %c0_12 = arith.constant 0 : index
    %21 = vector.load %arg5[%c0_11, %c0_12] : memref<32x128xbf16, #tpu.memory_space<vmem>>, vector<32x128xbf16>
    %cst_13 = arith.constant dense<0.000000e+00> : vector<32x128xf32>
    %22 = tpu.matmul %20, %21, %cst_13 {dimension_numbers = #tpu.dot_dimension_numbers<[1], [0], [0], [1], [0, 0, 1, 1], [], []>} : vector<32x32xbf16>, vector<32x128xbf16>, vector<32x128xf32> -> vector<32x128xf32>
    %cst_14 = arith.constant dense<0xFF800000> : vector<32xf32>
    %23 = vector.multi_reduction <maximumf>, %22, %cst_14 [1] : vector<32x128xf32> to vector<32xf32>
    %24 = vector.shape_cast %23 : vector<32xf32> to vector<32x1xf32>
    %25 = vector.broadcast %24 : vector<32x1xf32> to vector<32x128xf32>
    %26 = arith.subf %22, %25 : vector<32x128xf32>
    %27 = math.exp %26 : vector<32x128xf32>
    %cst_15 = arith.constant dense<0.000000e+00> : vector<32xf32>
    %28 = vector.multi_reduction <add>, %27, %cst_15 [1] : vector<32x128xf32> to vector<32xf32>
    %29 = vector.shape_cast %28 : vector<32xf32> to vector<32x1xf32>
    %30 = math.log %29 : vector<32x1xf32>
    %31 = arith.addf %24, %30 : vector<32x1xf32>
    %32 = vector.extract_strided_slice %22 {offsets = [16, 0], sizes = [16, 128], strides = [1, 1]} : vector<32x128xf32> to vector<16x128xf32>
    %33 = vector.extract_strided_slice %22 {offsets = [0, 0], sizes = [16, 128], strides = [1, 1]} : vector<32x128xf32> to vector<16x128xf32>
    %34 = arith.subf %32, %33 : vector<16x128xf32>
    %35 = vector.extract_strided_slice %31 {offsets = [16, 0], sizes = [16, 1], strides = [1, 1]} : vector<32x1xf32> to vector<16x1xf32>
    %36 = vector.extract_strided_slice %31 {offsets = [0, 0], sizes = [16, 1], strides = [1, 1]} : vector<32x1xf32> to vector<16x1xf32>
    %37 = arith.subf %35, %36 : vector<16x1xf32>
    %38 = vector.broadcast %37 : vector<16x1xf32> to vector<16x128xf32>
    %39 = arith.subf %34, %38 : vector<16x128xf32>
    %c0_16 = arith.constant 0 : index
    %c0_17 = arith.constant 0 : index
    %40 = vector.load %arg8[%c0_16, %c0_17] : memref<16x128xf32, #tpu.memory_space<vmem>>, vector<16x128xf32>
    tpu.vector_store %arg8[%c0_16, %c0_17], %39 {strides = array<i32>} : memref<16x128xf32, #tpu.memory_space<vmem>>, vector<16x128xf32>,
    %c0_18 = arith.constant 0 : index
    %c0_19 = arith.constant 0 : index
    %41 = vector.load %arg6[%c0_18, %c0_19] : memref<16x128xf32, #tpu.memory_space<vmem>>, vector<16x128xf32>
    %c0_20 = arith.constant 0 : index
    %c0_21 = arith.constant 0 : index
    %42 = memref.load %arg1[%c0_20, %c0_21] : memref<1x1xf32, #tpu.memory_space<smem>>
    %43 = vector.broadcast %42 : f32 to vector<16x128xf32>
    %44 = arith.mulf %43, %39 : vector<16x128xf32>
    %45 = arith.addf %41, %44 : vector<16x128xf32>
    %c0_22 = arith.constant 0 : index
    %c0_23 = arith.constant 0 : index
    %46 = vector.load %arg7[%c0_22, %c0_23] : memref<16x128xf32, #tpu.memory_space<vmem>>, vector<16x128xf32>
    tpu.vector_store %arg7[%c0_22, %c0_23], %45 {strides = array<i32>} : memref<16x128xf32, #tpu.memory_space<vmem>>, vector<16x128xf32>,
    return
  }
  func.func @transform_0(%arg0: i32) -> (i32, i32) {
    %c0_i32 = arith.constant 0 : i32
    %c0_i32_0 = arith.constant 0 : i32
    %c0_i32_1 = arith.constant 0 : i32
    return %c0_i32, %c0_i32_0 : i32, i32
  }
  func.func @transform_1(%arg0: i32) -> (i32, i32, i32) {
    %c0_i32 = arith.constant 0 : i32
    %c0_i32_0 = arith.constant 0 : i32
    %c0_i32_1 = arith.constant 0 : i32
    %c0_i32_2 = arith.constant 0 : i32
    return %c0_i32, %c0_i32_0, %c0_i32_1 : i32, i32, i32
  }
  func.func @transform_2(%arg0: i32) -> (i32, i32, i32) {
    %c0_i32 = arith.constant 0 : i32
    %c0_i32_0 = arith.constant 0 : i32
    %c0_i32_1 = arith.constant 0 : i32
    %c0_i32_2 = arith.constant 0 : i32
    return %c0_i32, %c0_i32_0, %c0_i32_1 : i32, i32, i32
  }
  func.func @transform_3(%arg0: i32) -> (i32, i32, i32) {
    %c0_i32 = arith.constant 0 : i32
    %c0_i32_0 = arith.constant 0 : i32
    %c0_i32_1 = arith.constant 0 : i32
    %c0_i32_2 = arith.constant 0 : i32
    return %c0_i32, %c0_i32_0, %c0_i32_1 : i32, i32, i32
  }
  func.func @transform_4(%arg0: i32) -> (i32, i32) {
    %c0_i32 = arith.constant 0 : i32
    %c0_i32_0 = arith.constant 0 : i32
    %c0_i32_1 = arith.constant 0 : i32
    return %c0_i32, %c0_i32_0 : i32, i32
  }
  func.func @transform_5(%arg0: i32) -> (i32, i32) {
    %c0_i32 = arith.constant 0 : i32
    %c0_i32_0 = arith.constant 0 : i32
    %c0_i32_1 = arith.constant 0 : i32
    return %c0_i32, %c0_i32_0 : i32, i32
  }
  func.func @transform_6(%arg0: i32) -> (i32, i32) {
    %c0_i32 = arith.constant 0 : i32
    %c0_i32_0 = arith.constant 0 : i32
    %c0_i32_1 = arith.constant 0 : i32
    return %c0_i32, %c0_i32_0 : i32, i32
  }
  func.func @transform_7(%arg0: i32) -> (i32, i32) {
    %c0_i32 = arith.constant 0 : i32
    %c0_i32_0 = arith.constant 0 : i32
    %c0_i32_1 = arith.constant 0 : i32
    return %c0_i32, %c0_i32_0 : i32, i32
  }
}

</mosaic_0001>

<llo_original>
// kernel: tpu_custom_call.1
$region0: #{tpu_custom_call.1}
  #allocation0 [shape = 'u32[]', space=smem, size = 0x4, offset = 0x4, fixed_abs, tag = 'smem constant byte address 0x4 - core index']
  #allocation1 [shape = 'u32[72,128]{1,0:T(1,128)}', space=vmem, size = 0x9000, scoped, tag = 'internal scratch']
  #allocation2 [shape = 'f32[1,1]{1,0:T(1,128)S(6)}', space=smem, size = 0x200, scoped, tag = 'scoped memory for tpu_custom_call.1']
  %s0 = inlined_call_operand.<no memory space> [shape: f32[1,1], index: 0, kind: input, shape index: {}]
  %s1 = inlined_call_operand.hbm [shape: f32[2,8,32], index: 1, kind: input, shape index: {}]
  %s2 = inlined_call_operand.vmem [shape: f32[2,1,32], index: 2, kind: input, shape index: {}]
  %s3 = inlined_call_operand.hbm [shape: bf16[2,32,64], index: 3, kind: input, shape index: {}]
  %s4 = inlined_call_operand.hbm [shape: bf16[32,128], index: 4, kind: input, shape index: {}]
  %s5 = inlined_call_operand.hbm [shape: f32[16,128], index: 5, kind: input, shape index: {}]
  %s6 = inlined_call_operand.hbm [shape: f32[16,128], index: 6, kind: output, shape index: {0}]
  %s7 = inlined_call_operand.hbm [shape: f32[16,128], index: 7, kind: output, shape index: {1}]
  %8 = xla_tuple %s6, %s7
  %s9 = sld [smem:[#allocation0]]
  $region58: #{tpu_custom_call.1} parent=0
    _
  %s11 = ssub.s32 1, %s9
  %s12 = scalar_select 0, %s11, %s9
  %13 = sst [smem:[#allocation2]] %s0
  $region1: #{tpu_custom_call.1} parent=0
    #allocation3 [shape = 'u8[8192]{0}', space=vmem, size = 0x2000, scoped, tag = 'input window, operand 1, single buffered']
    #allocation4 [shape = 's32[1]{0}', space=sflag, size = 0x4, scoped, tag = 'scoped memory for tpu_custom_call.1']
    #allocation5 [shape = 's32[1]{0}', space=sflag, size = 0x4, scoped, tag = 'scoped memory for tpu_custom_call.1']
    #allocation6 [shape = 'u8[16384]{0}', space=vmem, size = 0x4000, scoped, tag = 'input window, operand 3, single buffered']
    #allocation7 [shape = 's32[1]{0}', space=sflag, size = 0x4, scoped, tag = 'scoped memory for tpu_custom_call.1']
    #allocation8 [shape = 'u8[8192]{0}', space=vmem, size = 0x2000, scoped, tag = 'input window, operand 4, single buffered']
    #allocation9 [shape = 'u8[8192]{0}', space=vmem, size = 0x2000, scoped, tag = 'input window, operand 5, single buffered']
    #allocation10 [shape = 's32[1]{0}', space=sflag, size = 0x4, scoped, tag = 'scoped memory for tpu_custom_call.1']
    #allocation11 [shape = 'u8[8192]{0}', space=vmem, size = 0x2000, scoped, tag = 'output window, operand 0, single buffered']
    #allocation12 [shape = 'u8[8192]{0}', space=vmem, size = 0x2000, scoped, tag = 'output window, operand 1, single buffered']
    #allocation13 [shape = 's32[1]{0}', space=sflag, size = 0x4, scoped, tag = 'scoped memory for tpu_custom_call.1']
    %14 = vsyncpa [#allocation4], 0
    %15 = vsyncpa [#allocation7], 0
    %16 = vsyncpa [#allocation10], 0
    %17 = vsyncpa [#allocation5], 0
    %18 = vsyncpa [#allocation13], 0
    // Predicated region
    $region2: #{tpu_custom_call.1} parent=1 // pred_check
      _
    $region3: #{tpu_custom_call.1} parent=1 // pred_check_branch
      %20 = sbr.rel (0) target = $region5
    $region4: #{tpu_custom_call.1} parent=1 // pred_region
      _
    $region5: #{tpu_custom_call.1} parent=1 // pred_fallthru
      _
    // Predicated region
    $region6: #{tpu_custom_call.1} parent=1 // pred_check
      _
    $region7: #{tpu_custom_call.1} parent=1 // pred_check_branch
      %22 = sbr.rel (0) target = $region9
    $region8: #{tpu_custom_call.1} parent=1 // pred_region
      %24 = vsyncadd [#allocation4], 0
      %s25 = sshll.u32 %s1, 4
      %s26 = int_to_ptr.hbm [resolvable:$true] %s25
      %s27 = sshll.u32 [#allocation3], 4
      %s28 = int_to_ptr.vmem [resolvable:$true] %s27
      %33 = dma.hbm_to_vmem [thread:$0]  %s26, 256, %s28, [#allocation4], 128, 128, 8
    $region9: #{tpu_custom_call.1} parent=1 // pred_fallthru
      _
    // Predicated region
    $region10: #{tpu_custom_call.1} parent=1 // pred_check
      _
    $region11: #{tpu_custom_call.1} parent=1 // pred_check_branch
      %35 = sbr.rel (0) target = $region13
    $region12: #{tpu_custom_call.1} parent=1 // pred_region
      _
    $region13: #{tpu_custom_call.1} parent=1 // pred_fallthru
      _
    // Predicated region
    $region14: #{tpu_custom_call.1} parent=1 // pred_check
      _
    $region15: #{tpu_custom_call.1} parent=1 // pred_check_branch
      %37 = sbr.rel (0) target = $region17
    $region16: #{tpu_custom_call.1} parent=1 // pred_region
      %39 = vsyncadd [#allocation7], 0
      %s40 = sshll.u32 %s3, 4
      %s41 = int_to_ptr.hbm [resolvable:$true] %s40
      %s42 = sshll.u32 [#allocation6], 4
      %s43 = int_to_ptr.vmem [resolvable:$true] %s42
      %48 = dma.hbm_to_vmem [thread:$0]  %s41, 512, %s43, [#allocation7], 64, 64, 4
    $region17: #{tpu_custom_call.1} parent=1 // pred_fallthru
      _
    // Predicated region
    $region18: #{tpu_custom_call.1} parent=1 // pred_check
      _
    $region19: #{tpu_custom_call.1} parent=1 // pred_check_branch
      %50 = sbr.rel (0) target = $region21
    $region20: #{tpu_custom_call.1} parent=1 // pred_region
      %52 = vsyncadd [#allocation7], 0
      %s53 = sshll.u32 %s4, 4
      %s54 = int_to_ptr.hbm [resolvable:$true] %s53
      %s55 = sshll.u32 [#allocation8], 4
      %s56 = int_to_ptr.vmem [resolvable:$true] %s55
      %61 = dma.hbm_to_vmem [thread:$0]  %s54, 256, %s56, [#allocation7], 64, 64, 4
    $region21: #{tpu_custom_call.1} parent=1 // pred_fallthru
      _
    // Predicated region
    $region22: #{tpu_custom_call.1} parent=1 // pred_check
      _
    $region23: #{tpu_custom_call.1} parent=1 // pred_check_branch
      %63 = sbr.rel (0) target = $region25
    $region24: #{tpu_custom_call.1} parent=1 // pred_region
      %65 = vsyncadd [#allocation10], 0
      %s66 = sshll.u32 %s5, 4
      %s67 = int_to_ptr.hbm [resolvable:$true] %s66
      %s68 = sshll.u32 [#allocation9], 4
      %s69 = int_to_ptr.vmem [resolvable:$true] %s68
      %74 = dma.hbm_to_vmem [thread:$0]  %s67, 256, %s69, [#allocation10], 128, 128, 8
    $region25: #{tpu_custom_call.1} parent=1 // pred_fallthru
      _
    // Predicated region
    $region26: #{tpu_custom_call.1} parent=1 // pred_check
      _
    $region27: #{tpu_custom_call.1} parent=1 // pred_check_branch
      %76 = sbr.rel (0) target = $region29
    $region28: #{tpu_custom_call.1} parent=1 // pred_region
      %78 = dma.done [#allocation4], 256
    $region29: #{tpu_custom_call.1} parent=1 // pred_fallthru
      _
    // Predicated region
    $region30: #{tpu_custom_call.1} parent=1 // pred_check
      _
    $region31: #{tpu_custom_call.1} parent=1 // pred_check_branch
      %80 = sbr.rel (0) target = $region33
    $region32: #{tpu_custom_call.1} parent=1 // pred_region
      %82 = dma.done [#allocation7], 512
    $region33: #{tpu_custom_call.1} parent=1 // pred_fallthru
      _
    // Predicated region
    $region34: #{tpu_custom_call.1} parent=1 // pred_check
      _
    $region35: #{tpu_custom_call.1} parent=1 // pred_check_branch
      %84 = sbr.rel (0) target = $region37
    $region36: #{tpu_custom_call.1} parent=1 // pred_region
      %86 = dma.done [#allocation7], 256
    $region37: #{tpu_custom_call.1} parent=1 // pred_fallthru
      _
    // Predicated region
    $region38: #{tpu_custom_call.1} parent=1 // pred_check
      _
    $region39: #{tpu_custom_call.1} parent=1 // pred_check_branch
      %88 = sbr.rel (0) target = $region41
    $region40: #{tpu_custom_call.1} parent=1 // pred_region
      %90 = dma.done [#allocation10], 256
    $region41: #{tpu_custom_call.1} parent=1 // pred_fallthru
      _
    %v92 = vld [vmem:[#allocation3] sm:$0xff]
    %v93 = vld [vmem:[#allocation3 + $0x8] sm:$0xff]
    %v94 = vld [vmem:[%s2] sm:$0x1]
    %v95 = vld [vmem:[%s2 + $0x1] sm:$0x1]
    %v98 = vperm.slane %v94, 0
    %v99 = vperm.slane %v95, 0
    %v102 = vmul.f32 %v92, %v98
    %v103 = vmul.f32 %v93, %v99
    %v104 = vpack.c.bf16 %v102, %v102
    %v105 = vpack.c.bf16 %v103, %v103
    %v106 = vld [vmem:[#allocation6] sm:$0xf]
    %v107 = vld [vmem:[#allocation6 + $0x4] sm:$0xf]
    %v108 = vld [vmem:[#allocation6 + $0x8] sm:$0xf]
    %v109 = vld [vmem:[#allocation6 + $0xc] sm:$0xf]
    %v114 = vunpack.c.l.b16 %v106
    %v115 = vunpack.c.l.b16 %v107
    %v116 = vunpack.c.l.b16 %v108
    %v117 = vunpack.c.l.b16 %v109
    %v118 = vpack.c.b16 %v115, %v114
    %v119 = vpack.c.b16 %v117, %v116
    %vm122 = vcmask 261120
    %v124 = vsel %vm122, %v104, 0
    %126 = vmatpush.bf16.msra.mxu0 0
    %127 = vmatpush.bf16.msra.mxu0 0
    %128 = vmatpush.bf16.msra.mxu0 0
    %129 = vmatpush.bf16.msra.mxu0 0
    %130 = vmatpush.bf16.msra.mxu0 0
    %131 = vmatpush.bf16.msra.mxu0 0
    %132 = vmatpush.bf16.msra.mxu0 %v119
    %133 = vmatpush.bf16.msra.mxu0 %v118
    %134 = vmatmul.bf16.gmra.mxu0 %v124
    %v135 = vpop.f32.mrf.mxu0
    %v136 = vadd.f32 0.0, %v135
    %v137 = vpop.f32.mrf.mxu0
    %138 = vdwg.mxu0
    %s139 = scalar_lea.vmem [#allocation6], 16
    %v140 = vld [vmem:[%s139] sm:$0xf]
    %v141 = vld [vmem:[%s139 + $0x4] sm:$0xf]
    %v142 = vld [vmem:[%s139 + $0x8] sm:$0xf]
    %v143 = vld [vmem:[%s139 + $0xc] sm:$0xf]
    %v148 = vunpack.c.l.b16 %v140
    %v149 = vunpack.c.l.b16 %v141
    %v150 = vunpack.c.l.b16 %v142
    %v151 = vunpack.c.l.b16 %v143
    %v152 = vpack.c.b16 %v149, %v148
    %v153 = vpack.c.b16 %v151, %v150
    %v157 = vsel %vm122, %v105, 0
    %159 = vmatpush.bf16.msra.mxu0 0
    %160 = vmatpush.bf16.msra.mxu0 0
    %161 = vmatpush.bf16.msra.mxu0 0
    %162 = vmatpush.bf16.msra.mxu0 0
    %163 = vmatpush.bf16.msra.mxu0 0
    %164 = vmatpush.bf16.msra.mxu0 0
    %165 = vmatpush.bf16.msra.mxu0 %v153
    %166 = vmatpush.bf16.msra.mxu0 %v152
    %167 = vmatmul.bf16.gmra.mxu0 %v157
    %v168 = vpop.f32.mrf.mxu0
    %v169 = vadd.f32 0.0, %v168
    %v170 = vpop.f32.mrf.mxu0
    %171 = vdwg.mxu0
    %173 = vrot.lane.b32.xlu0 %v136, 96
    %v174 = vpop.permute.xlu0 %173
    %177 = vrot.lane.b32.xlu0 %v169, 96
    %v178 = vpop.permute.xlu0 %177
    %v180 = vpack.c.bf16 %v169, %v136
    %v181 = vpack.c.bf16 %v178, %v174
    %v182 = vld [vmem:[#allocation8] sm:$0xf]
    %v183 = vld [vmem:[#allocation8 + $0x4] sm:$0xf]
    %v184 = vld [vmem:[#allocation8 + $0x8] sm:$0xf]
    %v185 = vld [vmem:[#allocation8 + $0xc] sm:$0xf]
    %v190 = vunpack.c.l.b16 %v182
    %v191 = vunpack.c.l.b16 %v183
    %v192 = vunpack.c.l.b16 %v184
    %v193 = vunpack.c.l.b16 %v185
    %v194 = vpack.c.b16 %v191, %v190
    %v195 = vpack.c.b16 %v193, %v192
    %v199 = vsel %vm122, %v180, 0
    %v202 = vsel %vm122, %v181, 0
    %204 = vmatpush.bf16.msra.mxu0 0
    %205 = vmatpush.bf16.msra.mxu0 0
    %206 = vmatpush.bf16.msra.mxu0 0
    %207 = vmatpush.bf16.msra.mxu0 0
    %208 = vmatpush.bf16.msra.mxu0 0
    %209 = vmatpush.bf16.msra.mxu0 0
    %210 = vmatpush.bf16.msra.mxu0 %v195
    %211 = vmatpush.bf16.msra.mxu0 %v194
    %212 = vmatmul.bf16.gmra.mxu0 %v199
    %v213 = vpop.f32.mrf.mxu0
    %v214 = vadd.f32 0.0, %v213
    %v215 = vpop.f32.mrf.mxu0
    %v216 = vadd.f32 0.0, %v215
    %217 = vmatmul.bf16.gmra.mxu0 %v202
    %v218 = vpop.f32.mrf.mxu0
    %v219 = vadd.f32 0.0, %v218
    %v220 = vpop.f32.mrf.mxu0
    %v221 = vadd.f32 0.0, %v220
    %222 = vdwg.mxu0
    %223 = vmax.xlane.f32.xlu0 %v214
    %v224 = vpop.xlane.xlu0 %223
    %225 = vmax.xlane.f32.xlu0 %v216
    %v226 = vpop.xlane.xlu0 %225
    %227 = vmax.xlane.f32.xlu0 %v219
    %v228 = vpop.xlane.xlu0 %227
    %229 = vmax.xlane.f32.xlu0 %v221
    %v230 = vpop.xlane.xlu0 %229
    %v231 = vsub.f32 %v214, %v224
    %v232 = vsub.f32 %v216, %v226
    %v233 = vsub.f32 %v219, %v228
    %v234 = vsub.f32 %v221, %v230
    %v235 = vmul.f32 %v231, 1.442695
    %v236 = vpow.pop %v235
    %v237 = vmul.f32 %v232, 1.442695
    %v238 = vpow.pop %v237
    %v239 = vmul.f32 %v233, 1.442695
    %v240 = vpow.pop %v239
    %v241 = vmul.f32 %v234, 1.442695
    %v242 = vpow.pop %v241
    %243 = vadd.xlane.f32.xlu0 %v236
    %v244 = vpop.xlane.xlu0 %243
    %245 = vadd.xlane.f32.xlu0 %v238
    %v246 = vpop.xlane.xlu0 %245
    %247 = vadd.xlane.f32.xlu0 %v240
    %v248 = vpop.xlane.xlu0 %247
    %249 = vadd.xlane.f32.xlu0 %v242
    %v250 = vpop.xlane.xlu0 %249
    %v251 = vlog2.pop %v244
    %v252 = vmul.f32 %v251, 0.6931472
    %v253 = vlog2.pop %v246
    %v254 = vmul.f32 %v253, 0.6931472
    %v255 = vlog2.pop %v248
    %v256 = vmul.f32 %v255, 0.6931472
    %v257 = vlog2.pop %v250
    %v258 = vmul.f32 %v257, 0.6931472
    %v259 = vadd.f32 %v224, %v252
    %v260 = vadd.f32 %v226, %v254
    %v261 = vadd.f32 %v228, %v256
    %v262 = vadd.f32 %v230, %v258
    %v263 = vsub.f32 %v219, %v214
    %v264 = vsub.f32 %v221, %v216
    %v265 = vsub.f32 %v261, %v259
    %v266 = vsub.f32 %v262, %v260
    %v267 = vsub.f32 %v263, %v265
    %v268 = vsub.f32 %v264, %v266
    %269 = vst [vmem:[#allocation12] sm:$0xff] %v267
    %270 = vst [vmem:[#allocation12 + $0x8] sm:$0xff] %v268
    %v271 = vld [vmem:[#allocation9] sm:$0xff]
    %v272 = vld [vmem:[#allocation9 + $0x8] sm:$0xff]
    %s273 = sld [smem:[#allocation2]]
    %v274 = vstv %s273
    %v275 = vmul.f32 %v274, %v267
    %v276 = vmul.f32 %v274, %v268
    %v277 = vadd.f32 %v271, %v275
    %v278 = vadd.f32 %v272, %v276
    %279 = vst [vmem:[#allocation11] sm:$0xff] %v277
    %280 = vst [vmem:[#allocation11 + $0x8] sm:$0xff] %v278
    // Predicated region
    $region42: #{tpu_custom_call.1} parent=1 // pred_check
      _
    $region43: #{tpu_custom_call.1} parent=1 // pred_check_branch
      %282 = sbr.rel (0) target = $region45
    $region44: #{tpu_custom_call.1} parent=1 // pred_region
      %284 = vsyncadd [#allocation5], 0
      %s285 = sshll.u32 [#allocation11], 4
      %s286 = int_to_ptr.vmem [resolvable:$true] %s285
      %s287 = sshll.u32 %s6, 4
      %s288 = int_to_ptr.hbm [resolvable:$true] %s287
      %293 = dma.vmem_to_hbm [thread:$0]  %s286, 256, %s288, [#allocation5], 128, 128, 8
    $region45: #{tpu_custom_call.1} parent=1 // pred_fallthru
      _
    // Predicated region
    $region46: #{tpu_custom_call.1} parent=1 // pred_check
      _
    $region47: #{tpu_custom_call.1} parent=1 // pred_check_branch
      %295 = sbr.rel (0) target = $region49
    $region48: #{tpu_custom_call.1} parent=1 // pred_region
      %297 = vsyncadd [#allocation13], 0
      %s298 = sshll.u32 [#allocation12], 4
      %s299 = int_to_ptr.vmem [resolvable:$true] %s298
      %s300 = sshll.u32 %s7, 4
      %s301 = int_to_ptr.hbm [resolvable:$true] %s300
      %306 = dma.vmem_to_hbm [thread:$0]  %s299, 256, %s301, [#allocation13], 128, 128, 8
    $region49: #{tpu_custom_call.1} parent=1 // pred_fallthru
      _
    // Predicated region
    $region50: #{tpu_custom_call.1} parent=1 // pred_check
      _
    $region51: #{tpu_custom_call.1} parent=1 // pred_check_branch
      %308 = sbr.rel (0) target = $region53
    $region52: #{tpu_custom_call.1} parent=1 // pred_region
      %310 = dma.done [#allocation5], 256
    $region53: #{tpu_custom_call.1} parent=1 // pred_fallthru
      _
    // Predicated region
    $region54: #{tpu_custom_call.1} parent=1 // pred_check
      _
    $region55: #{tpu_custom_call.1} parent=1 // pred_check_branch
      %312 = sbr.rel (0) target = $region57
    $region56: #{tpu_custom_call.1} parent=1 // pred_region
      %314 = dma.done [#allocation13], 256
    $region57: #{tpu_custom_call.1} parent=1 // pred_fallthru
      _
    %315 = vsyncpa [#allocation4], 1
    %316 = vsyncpa [#allocation7], 1
    %317 = vsyncpa [#allocation10], 1
    %318 = vsyncpa [#allocation5], 1
    %319 = vsyncpa [#allocation13], 1

</llo_original>
